<compile_context>
chip_gen: v7x
topology: tpu7x:2x2x1
jax: 0.10.0
libtpu: 0.0.40
codegen_flags: <defaults>
</compile_context>

<pallas_src>
import functools

import numpy as np
import jax
import jax.numpy as jnp
from jax.experimental import pallas as pl
from jax.experimental.pallas import tpu as pltpu


_HALF_PI = float(np.pi / 2.0)
_LANES = 128
_SUBLANES = 8
# Double-buffered (input block + output block) budget; safe on v5e/v6e/v7x.
_VMEM_BUDGET_BYTES = 8 * 1024 * 1024
_VMEM_LIMIT_BYTES = 32 * 1024 * 1024
_BYPASS_ELEMENTS = 1 << 16  # below this, XLA's fused cos/sin/concat wins


def _reference(dihedrals):
    """Pure-JAX reference mirroring the PyTorch forward."""
    return jnp.concatenate([jnp.cos(dihedrals), jnp.sin(dihedrals)], axis=-1)


# --------------------------------------------------------------------------- kernels
def _sin_phase_kernel(x2_ref, phase_ref, out_ref):
    # x2_ref:    (ti, W) rows of duplicated angles  [x_row | x_row] per original row
    # phase_ref: (1,  W) per-lane phase  [pi/2]*D ++ [0]*D tiled G times
    # out_ref:   (ti, W) final layout    [cos(x_row) | sin(x_row)] per original row
    x2 = x2_ref[...].astype(jnp.float32)
    out_ref[...] = jnp.sin(x2 + phase_ref[...]).astype(out_ref.dtype)


def _cos_sin_wide_kernel(d, x_ref, out_ref):
    # Fast path for D % 128 == 0: both halves are lane-aligned full stores.
    x = x_ref[...].astype(jnp.float32)
    out_ref[:, :d] = jnp.cos(x).astype(out_ref.dtype)
    out_ref[:, d:] = jnp.sin(x).astype(out_ref.dtype)


# --------------------------------------------------------------------------- helpers
def _pick_row_tile(n_rows, row_bytes, override=None):
    """Largest multiple-of-8 row tile whose double-buffered in+out blocks fit the budget."""
    if override is not None:
        tile = int(override)
    else:
        tile = max(_SUBLANES, _VMEM_BUDGET_BYTES // (2 * max(row_bytes, 1)))
    tile = (tile // _SUBLANES) * _SUBLANES
    if tile <= 0 or tile >= n_rows:
        return n_rows  # single block == full extent (always a legal block dim)
    return tile


def _compiler_params():
    return pltpu.CompilerParams(
        dimension_semantics=("parallel",),
        vmem_limit_bytes=_VMEM_LIMIT_BYTES,
    )


# --------------------------------------------------------------------------- paths
def _embed_fold(x2d, d, block_rows=None):
    """General path (D not a multiple of 128): fold rows into lanes + phase trick."""
    m = x2d.shape[0]
    two_d = 2 * d

    # Fold G rows into the lane axis (G = largest power-of-two divisor of M, capped so
    # the super-row width stays <= 1024 lanes).  W = G * 2D is the block's last dim.
    g_cap = max(1, 1024 // two_d)
    g = 1
    while (g * 2) <= g_cap and (m % (g * 2)) == 0:
        g *= 2
    w = g * two_d
    m_sup = m // g

    # Duplicate each row: [x | x].  Combined with the per-lane phase this makes the
    # kernel a single element-wise sin() that emits the final interleaved layout.
    x_dup = jnp.concatenate([x2d, x2d], axis=-1).reshape(m_sup, w)

    phase_row = jnp.asarray(
        np.tile(
            np.concatenate(
                [np.full((d,), _HALF_PI, np.float32), np.zeros((d,), np.float32)]
            ),
            g,
        ).reshape(1, w)
    )

    isz = x2d.dtype.itemsize
    row_bytes = 2 * w * isz  # input row + output row (same width)
    ti = _pick_row_tile(m_sup, row_bytes, block_rows)
    grid = (pl.cdiv(m_sup, ti),)

    out = pl.pallas_call(
        _sin_phase_kernel,
        out_shape=jax.ShapeDtypeStruct((m_sup, w), x2d.dtype),
        grid=grid,
        in_specs=[
            pl.BlockSpec((ti, w), lambda i: (i, 0)),
            pl.BlockSpec((1, w), lambda i: (0, 0)),
        ],
        out_specs=pl.BlockSpec((ti, w), lambda i: (i, 0)),
        compiler_params=_compiler_params(),
        cost_estimate=pl.CostEstimate(
            flops=4 * m * two_d,
            transcendentals=m * two_d,
            bytes_accessed=2 * m_sup * w * isz + 4 * w,
        ),
    )(x_dup, phase_row)
    return out.reshape(m, two_d)


def _embed_wide(x2d, d, block_rows=None):
    """Fast path for D % 128 == 0: no duplication, cos/sin into lane-aligned halves."""
    m = x2d.shape[0]
    two_d = 2 * d
    isz = x2d.dtype.itemsize
    row_bytes = (d + two_d) * isz
    ti = _pick_row_tile(m, row_bytes, block_rows)
    grid = (pl.cdiv(m, ti),)

    return pl.pallas_call(
        functools.partial(_cos_sin_wide_kernel, d),
        out_shape=jax.ShapeDtypeStruct((m, two_d), x2d.dtype),
        grid=grid,
        in_specs=[pl.BlockSpec((ti, d), lambda i: (i, 0))],
        out_specs=pl.BlockSpec((ti, two_d), lambda i: (i, 0)),
        compiler_params=_compiler_params(),
        cost_estimate=pl.CostEstimate(
            flops=4 * m * two_d,
            transcendentals=m * two_d,
            bytes_accessed=m * (d + two_d) * isz,
        ),
    )(x2d)


# --------------------------------------------------------------------------- public API
def dihedral_embedding(dihedrals, *, use_pallas=None, block_rows=None):
    """dihedrals: (..., D) -> (..., 2*D), matching torch.cat([cos, sin], dim=-1)."""
    *batch, d = dihedrals.shape

    if use_pallas is None:
        use_pallas = dihedrals.size >= _BYPASS_ELEMENTS
    if not use_pallas:
        return _reference(dihedrals)

    x2d = dihedrals.reshape(-1, d)
    if d % _LANES == 0:
        out = _embed_wide(x2d, d, block_rows)
    else:
        out = _embed_fold(x2d, d, block_rows)
    return out.reshape(*batch, 2 * d)


# --------------------------------------------------------------------------- demo / check
if __name__ == "__main__":
    key = jax.random.PRNGKey(0)
    k1, k2 = jax.random.split(key)

    # Case 1: typical dihedral shape (batch=2, residues=16, 4 angles per residue).
    d1 = jax.random.uniform(
        k1, (2, 16, 4), dtype=jnp.float32, minval=-jnp.pi, maxval=jnp.pi
    )
    out1 = jax.block_until_ready(dihedral_embedding(d1, use_pallas=True))
    ref1 = _reference(d1)
    assert out1.shape == (2, 16, 8), out1.shape
    assert jnp.allclose(out1, ref1, atol=1e-5, rtol=1e-5), float(
        jnp.max(jnp.abs(out1 - ref1))
    )

    # Case 2: small row-tile override -> multiple grid steps + ragged last block.
    d2 = jax.random.uniform(
        k2, (2, 264, 4), dtype=jnp.float32, minval=-jnp.pi, maxval=jnp.pi
    )
    out2 = jax.block_until_ready(dihedral_embedding(d2, use_pallas=True, block_rows=8))
    ref2 = _reference(d2)
    assert out2.shape == (2, 264, 8), out2.shape
    assert jnp.allclose(out2, ref2, atol=1e-5, rtol=1e-5), float(
        jnp.max(jnp.abs(out2 - ref2))
    )

    # Auto path (tiny input -> XLA bypass) also matches.
    out_auto = jax.block_until_ready(dihedral_embedding(d1))
    assert jnp.allclose(out_auto, ref1, atol=1e-5, rtol=1e-5)

    print("KERNEL_OK")
</pallas_src>

<mosaic_0001>
module attributes {stable_mosaic.version = 11 : i64} {
  func.func @_sin_phase_kernel(%arg0: i32, %arg1: memref<1x256xf32, #tpu.memory_space<vmem>>, %arg2: memref<1x256xf32, #tpu.memory_space<vmem>>, %arg3: memref<1x256xf32, #tpu.memory_space<vmem>>) attributes {dimension_semantics = [#tpu.dimension_semantics<parallel>], iteration_bounds = array<i64: 1>, scalar_prefetch = 0 : i64, scratch_operands = 0 : i64, tpu.core_type = #tpu.core_type<tc>, window_params = [{transform_indices = @transform_0, window_bounds = array<i64: 1, 256>}, {pipeline_mode = #tpu.pipeline_mode<synchronous>, transform_indices = @transform_1, window_bounds = array<i64: 1, 256>}, {transform_indices = @transform_2, window_bounds = array<i64: 1, 256>}]} {
    %c0 = arith.constant 0 : index
    %c0_0 = arith.constant 0 : index
    %0 = vector.load %arg1[%c0, %c0_0] : memref<1x256xf32, #tpu.memory_space<vmem>>, vector<1x256xf32>
    %c0_1 = arith.constant 0 : index
    %c0_2 = arith.constant 0 : index
    %1 = vector.load %arg2[%c0_1, %c0_2] : memref<1x256xf32, #tpu.memory_space<vmem>>, vector<1x256xf32>
    %2 = arith.addf %0, %1 : vector<1x256xf32>
    %3 = math.sin %2 : vector<1x256xf32>
    %c0_3 = arith.constant 0 : index
    %c0_4 = arith.constant 0 : index
    %4 = vector.load %arg3[%c0_3, %c0_4] : memref<1x256xf32, #tpu.memory_space<vmem>>, vector<1x256xf32>
    tpu.vector_store %arg3[%c0_3, %c0_4], %3 {strides = array<i32>} : memref<1x256xf32, #tpu.memory_space<vmem>>, vector<1x256xf32>,
    return
  }
  func.func @transform_0(%arg0: i32) -> (i32, i32) {
    %c0_i32 = arith.constant 0 : i32
    %c0_i32_0 = arith.constant 0 : i32
    return %arg0, %c0_i32 : i32, i32
  }
  func.func @transform_1(%arg0: i32) -> (i32, i32) {
    %c0_i32 = arith.constant 0 : i32
    %c0_i32_0 = arith.constant 0 : i32
    %c0_i32_1 = arith.constant 0 : i32
    return %c0_i32, %c0_i32_0 : i32, i32
  }
  func.func @transform_2(%arg0: i32) -> (i32, i32) {
    %c0_i32 = arith.constant 0 : i32
    %c0_i32_0 = arith.constant 0 : i32
    return %arg0, %c0_i32 : i32, i32
  }
}

</mosaic_0001>

<llo_original>
// kernel: tpu_custom_call.1
$region0: #{tpu_custom_call.1}
  #allocation0 [shape = 'u32[]', space=smem, size = 0x4, offset = 0x4, fixed_abs, tag = 'smem constant byte address 0x4 - core index']
  #allocation1 [shape = 'u32[144,128]{1,0:T(1,128)}', space=vmem, size = 0x12000, scoped, tag = 'internal scratch']
  %s0 = inlined_call_operand.hbm [shape: f32[1,256], index: 0, kind: input, shape index: {}]
  %s1 = inlined_call_operand.vmem [shape: f32[1,256], index: 1, kind: input, shape index: {}]
  %s2 = inlined_call_operand.hbm [shape: f32[1,256], index: 2, kind: output, shape index: {}]
  %s3 = sld [smem:[#allocation0]]
  $region22: #{tpu_custom_call.1} parent=0
    _
  %s5 = ssub.s32 1, %s3
  %s6 = scalar_select 0, %s5, %s3
  $region1: #{tpu_custom_call.1} parent=0
    #allocation2 [shape = 'u8[1024]{0}', space=vmem, size = 0x400, scoped, tag = 'input window, operand 0, single buffered']
    #allocation3 [shape = 's32[1]{0}', space=sflag, size = 0x4, scoped, tag = 'scoped memory for tpu_custom_call.1']
    #allocation4 [shape = 's32[1]{0}', space=sflag, size = 0x4, scoped, tag = 'scoped memory for tpu_custom_call.1']
    #allocation5 [shape = 'u8[1024]{0}', space=vmem, size = 0x400, scoped, tag = 'output window, operand 0, single buffered']
    %7 = vsyncpa [#allocation3], 0
    %8 = vsyncpa [#allocation4], 0
    // Predicated region
    $region2: #{tpu_custom_call.1} parent=1 // pred_check
      _
    $region3: #{tpu_custom_call.1} parent=1 // pred_check_branch
      %10 = sbr.rel (0) target = $region5
    $region4: #{tpu_custom_call.1} parent=1 // pred_region
      %s12 = ssub.s32 32, 32
      %13 = vsyncadd [#allocation3], %s12
      %s15 = sshll.u32 [#allocation2], 4
      %s16 = int_to_ptr.vmem [resolvable:$true] %s15
      %18 = dma.hbm_to_vmem [thread:$0]  %s0, 32, %s16, [#allocation3]
    $region5: #{tpu_custom_call.1} parent=1 // pred_fallthru
      _
    // Predicated region
    $region6: #{tpu_custom_call.1} parent=1 // pred_check
      _
    $region7: #{tpu_custom_call.1} parent=1 // pred_check_branch
      %20 = sbr.rel (0) target = $region9
    $region8: #{tpu_custom_call.1} parent=1 // pred_region
      _
    $region9: #{tpu_custom_call.1} parent=1 // pred_fallthru
      _
    // Predicated region
    $region10: #{tpu_custom_call.1} parent=1 // pred_check
      _
    $region11: #{tpu_custom_call.1} parent=1 // pred_check_branch
      %22 = sbr.rel (0) target = $region13
    $region12: #{tpu_custom_call.1} parent=1 // pred_region
      %23 = dma.done [#allocation3], 32
    $region13: #{tpu_custom_call.1} parent=1 // pred_fallthru
      _
    %v24 = vld [vmem:[#allocation2] sm:$0x3]
    %v25 = vld [vmem:[%s1] sm:$0x3]
    %v26 = vadd.f32 %v24, %v25
    %v27 = vand.u32 2147483647, %v26
    %vm28 = vcmp.le.f32.partialorder %v27, 0.7853982
    %vm29 = vcmp.lt.s32.totalorder %v26, 0
    %v30 = vand.u32 %v26, 2139095040
    %v31 = vshrl.u32 %v30, 23
    %v32 = vsub.s32 %v31, 127
    %v33 = vand.u32 2147483647, %v26
    %v34 = vand.u32 %v33, 8388607
    %v35 = vor.u32 %v34, 8388608
    %v36 = vsub.s32 0, %v35
    %v37 = vadd.s32 %v32, 1
    %vm38 = vcmp.gt.s32.totalorder %v37, 0
    %v39 = vsel %vm38, %v37, 0
    %v40 = vshrl.u32 %v39, 5
    %v41 = vand.u32 %v39, 31
    %v42 = vsub.s32 32, %v41
    %v43 = vshrl.u32 683565275, %v42
    %v44 = vshll.u32 683565275, %v41
    %v45 = vshrl.u32 2475754826, %v42
    %v46 = vor.u32 %v44, %v45
    %v47 = vshll.u32 2475754826, %v41
    %v48 = vshrl.u32 2131351028, %v42
    %v49 = vor.u32 %v47, %v48
    %v50 = vshll.u32 2131351028, %v41
    %v51 = vshrl.u32 2102212464, %v42
    %v52 = vor.u32 %v50, %v51
    %v53 = vshll.u32 2102212464, %v41
    %v54 = vshrl.u32 920167782, %v42
    %v55 = vor.u32 %v53, %v54
    %v56 = vshll.u32 920167782, %v41
    %v57 = vshrl.u32 1326507024, %v42
    %v58 = vor.u32 %v56, %v57
    %vm59 = vcmp.lt.s32.totalorder %v40, 1
    %vm60 = vcmp.lt.s32.totalorder %v40, 2
    %vm61 = vcmp.lt.s32.totalorder %v40, 3
    %vm62 = vcmp.lt.s32.totalorder %v40, 4
    %v63 = vsel %vm59, %v43, %v46
    %v64 = vsel %vm62, %v52, 2102212464
    %v65 = vsel %vm61, %v49, %v64
    %v66 = vsel %vm60, %v63, %v65
    %v67 = vsel %vm59, %v46, %v49
    %v68 = vsel %vm62, %v55, 920167782
    %v69 = vsel %vm61, %v52, %v68
    %v70 = vsel %vm60, %v67, %v69
    %v71 = vsel %vm59, %v49, %v52
    %v72 = vsel %vm62, %v58, 1326507024
    %v73 = vsel %vm61, %v55, %v72
    %v74 = vsel %vm60, %v71, %v73
    %v75 = vshll.u32 %v35, 8
    %v76 = vmul.u32.u64.compose %v75, %v74
    %v77 = vextract.low.u32 %v76
    %v78 = vextract.high.u32 %v76
    %v79 = vmul.u32.u64.compose %v75, %v70
    %v80 = vextract.low.u32 %v79
    %v81 = vextract.high.u32 %v79
    %v82 = vmul.u32 %v75, %v66
    %v83 = vadd.s32 %v78, %v80
    %vm84 = vc.u32 %v78, %v80
    %v85 = vadd.s32 %v81, 1
    %v86 = vsel %vm84, %v85, %v81
    %v87 = vadd.s32 %v82, %v86
    %v88 = vadd.s32 %v87, 536870912
    %v89 = vshrl.u32 %v88, 30
    %v90 = vshll.u32 %v89, 30
    %v91 = vsub.s32 %v87, %v90
    %vm92 = vcmp.lt.s32.totalorder %v91, 0
    %v93 = vsub.s32 0, %v91
    %v94 = vsel %vm92, %v93, %v91
    %v95 = vclz %v94
    %v96 = vsub.s32 %v95, 2
    %vm97 = vcmp.gt.s32.totalorder 0, %v96
    %v98 = vsel %vm97, 0, %v96
    %v99 = vsub.s32 32, %v98
    %v100 = vshll.u32 %v91, %v98
    %v101 = vshrl.u32 %v83, %v99
    %v102 = vor.u32 %v100, %v101
    %v103 = vsub.s32 4294967266, %v98
    %v104 = vadd.s32 %v103, 127
    %v105 = vshll.u32 %v104, 23
    %v106 = vor.u32 4788187, %v105
    %v107 = vand.u32 2147483647, %v106
    %v109 = vcvt.s32.f32 %v102
    %v110 = vmul.f32 %v109, %v107
    %v111 = vxor.u32 %v110, 2147483648
    %v112 = vsel %vm29, %v111, %v110
    %v113 = vsub.s32 4, %v89
    %v114 = vsel %vm29, %v113, %v89
    %v115 = vsel %vm28, %v26, %v112
    %v116 = vsel %vm28, 0, %v114
    %v117 = vcosq.f32.pop %v115
    %v118 = vsinq.f32.pop %v115
    %vm119 = vweird.f32 %v26
    %v120 = vadd.s32 %v116, 3
    %v121 = vand.u32 %v120, 3
    %vm122 = vcmp.lt.s32.totalorder %v121, 2
    %vm123 = vcmp.eq.s32.totalorder %v121, 0
    %v124 = vxor.u32 %v118, 2147483648
    %v125 = vsel %vm123, %v117, %v124
    %vm126 = vcmp.eq.s32.totalorder %v121, 2
    %v127 = vxor.u32 %v117, 2147483648
    %v128 = vsel %vm126, %v127, %v118
    %v129 = vsel %vm122, %v125, %v128
    %v130 = vsel %vm119, nan, %v129
    %v131 = vlaneseq
    %vm132 = vcmp.ge.s32.totalorder %v131, 0
    %vm133 = vcmp.lt.s32.totalorder %v131, 256
    %vm134 = vmand %vm132, %vm133
    %135 = vst.msk [vmem:[#allocation5] sm:$0x3] %vm134, %v130
    // Predicated region
    $region14: #{tpu_custom_call.1} parent=1 // pred_check
      _
    $region15: #{tpu_custom_call.1} parent=1 // pred_check_branch
      %137 = sbr.rel (0) target = $region17
    $region16: #{tpu_custom_call.1} parent=1 // pred_region
      %s139 = ssub.s32 32, 32
      %140 = vsyncadd [#allocation4], %s139
      %s142 = sshll.u32 [#allocation5], 4
      %s143 = int_to_ptr.vmem [resolvable:$true] %s142
      %145 = dma.vmem_to_hbm [thread:$0]  %s143, 32, %s2, [#allocation4]
    $region17: #{tpu_custom_call.1} parent=1 // pred_fallthru
      _
    // Predicated region
    $region18: #{tpu_custom_call.1} parent=1 // pred_check
      _
    $region19: #{tpu_custom_call.1} parent=1 // pred_check_branch
      %147 = sbr.rel (0) target = $region21
    $region20: #{tpu_custom_call.1} parent=1 // pred_region
      %148 = dma.done [#allocation4], 32
    $region21: #{tpu_custom_call.1} parent=1 // pred_fallthru
      _
    %149 = vsyncpa [#allocation3], 1
    %150 = vsyncpa [#allocation4], 1

</llo_original>
